<compile_context>
chip_gen: v7x
topology: tpu7x:2x2x1
jax: 0.10.0
libtpu: 0.0.40
codegen_flags: <defaults>
</compile_context>

<pallas_src>
import jax
import jax.numpy as jnp
from jax.experimental import pallas as pl
from jax.experimental.pallas import tpu as pltpu


D_CONV = 16
D_FF = 32
IN_FLAT = 6               # 3 primitives x 2 (L/R), row-major flatten of (3, 2)
H1 = 2 * D_FF             # 64
H2 = D_FF                 # 32
OUT_DIM = 3


def _round_up(n, m):
    return ((n + m - 1) // m) * m


def _cdiv(a, b):
    return -(-a // b)


def _chip_budget():
    """(max block columns, vmem_limit_bytes) sized per TPU generation."""
    try:
        vmem = pltpu.get_tpu_info().vmem_capacity_bytes
    except Exception:
        vmem = 64 << 20                      # conservative (v7x-safe) fallback
    if vmem >= (100 << 20):                  # v5e / v6e: 128 MiB physical VMEM
        return 16384, 64 << 20
    return 8192, 48 << 20                    # v7x: 64 MiB physical VMEM


def _pick_blocks(batch):
    """Choose (block_b, n_blocks, vmem_limit) with minimal padding and >=2
    grid steps whenever possible (so both v7x TensorCores get work)."""
    max_block, vmem_limit = _chip_budget()
    b128 = _round_up(max(batch, 1), 128)
    n_blocks = max(1, _cdiv(b128, max_block))
    if b128 > 128 and n_blocks == 1:
        n_blocks = 2
    block_b = _round_up(_cdiv(b128, n_blocks), 128)
    return block_b, n_blocks, vmem_limit


def _classifier_kernel(x_ref, wc_ref, bc_ref, w1a_ref, w1b_ref, b1_ref,
                       w2_ref, b2_ref, w3_ref, b3_ref, out_ref):
    # x_ref: (6, BLOCK_B) bf16 -- RAW features on sublanes, batch on lanes.
    # Normalization is folded into the weights, so x is used directly.
    x = x_ref[...]

    # Conv2d(1,16,(3,2)) == dense 6 -> 16 on the flattened input.
    conv = jnp.dot(wc_ref[...], x,
                   preferred_element_type=jnp.float32) + bc_ref[...]
    conv = jnp.maximum(conv.astype(jnp.bfloat16), 0)            # (16, B) bf16

    # fc1(concat([conv, xn])) expressed as two dots (no 22-row concat).
    h1 = (jnp.dot(w1a_ref[...], conv, preferred_element_type=jnp.float32)
          + jnp.dot(w1b_ref[...], x, preferred_element_type=jnp.float32)
          + b1_ref[...])
    h1 = jnp.maximum(h1.astype(jnp.bfloat16), 0)                # (64, B) bf16
    # dropout(p=0.2) -> identity in eval mode.

    h2 = jnp.dot(w2_ref[...], h1,
                 preferred_element_type=jnp.float32) + b2_ref[...]
    h2 = jnp.maximum(h2.astype(jnp.bfloat16), 0)                # (32, B) bf16
    # dropout(p=0.2) -> identity in eval mode.

    out_ref[...] = (jnp.dot(w3_ref[...], h2,
                            preferred_element_type=jnp.float32)
                    + b3_ref[...])                              # (3, B) f32


def _fold_params(params):
    """Fold the input normalization into the conv and fc1 residual weights."""
    mn = jnp.repeat(params["input_min"], 2)                     # (6,)
    mx = jnp.repeat(params["input_max"], 2)
    scale = 2.0 / (mx - mn)
    shift = -2.0 * mn / (mx - mn) - 1.0

    wc = params["wc"].reshape(D_CONV, IN_FLAT)                  # conv as dense
    wc_f = (wc * scale[None, :]).astype(jnp.bfloat16)
    bc_f = (params["bc"] + wc @ shift).reshape(D_CONV, 1)

    w1 = params["w1"]                                           # (64, 22)
    w1a = w1[:, :D_CONV].astype(jnp.bfloat16)                   # acts on conv
    w1b = (w1[:, D_CONV:] * scale[None, :]).astype(jnp.bfloat16)  # acts on x
    b1_f = (params["b1"] + w1[:, D_CONV:] @ shift).reshape(H1, 1)

    w2 = params["w2"].astype(jnp.bfloat16)                      # (32, 64)
    b2 = params["b2"].reshape(H2, 1)
    w3 = params["w3"].astype(jnp.bfloat16)                      # (3, 32)
    b3 = params["b3"].reshape(OUT_DIM, 1)
    return wc_f, bc_f, w1a, w1b, b1_f, w2, b2, w3, b3


def _run_kernel(x_t_bf16, folded, block_b, n_blocks, vmem_limit):
    """x_t_bf16: (6, n_blocks*block_b) bf16 -> (3, n_blocks*block_b) f32."""
    b_pad = n_blocks * block_b
    wc, bc, w1a, w1b, b1, w2, b2, w3, b3 = folded

    def resident(shape):
        # Constant index map -> DMA'd once, stays VMEM-resident across steps.
        return pl.BlockSpec(shape, lambda i: (0, 0))

    flops = 2 * b_pad * (IN_FLAT * D_CONV + D_CONV * H1 + IN_FLAT * H1
                         + H1 * H2 + H2 * OUT_DIM)
    param_bytes = (2 * (D_CONV * IN_FLAT + H1 * D_CONV + H1 * IN_FLAT
                        + H2 * H1 + OUT_DIM * H2)
                   + 4 * (D_CONV + H1 + H2 + OUT_DIM))
    bytes_accessed = b_pad * (IN_FLAT * 2 + OUT_DIM * 4) + param_bytes

    return pl.pallas_call(
        _classifier_kernel,
        out_shape=jax.ShapeDtypeStruct((OUT_DIM, b_pad), jnp.float32),
        grid=(n_blocks,),
        in_specs=[
            pl.BlockSpec((IN_FLAT, block_b), lambda i: (0, i)),   # x streams
            resident((D_CONV, IN_FLAT)),       # folded conv weight
            resident((D_CONV, 1)),             # folded conv bias
            resident((H1, D_CONV)),            # fc1 weight (conv part)
            resident((H1, IN_FLAT)),           # fc1 weight (residual, folded)
            resident((H1, 1)),                 # folded fc1 bias
            resident((H2, H1)),                # fc2 weight
            resident((H2, 1)),                 # fc2 bias
            resident((OUT_DIM, H2)),           # fc3 weight
            resident((OUT_DIM, 1)),            # fc3 bias
        ],
        out_specs=pl.BlockSpec((OUT_DIM, block_b), lambda i: (0, i)),
        compiler_params=pltpu.CompilerParams(
            dimension_semantics=("parallel",),
            vmem_limit_bytes=vmem_limit),
        cost_estimate=pl.CostEstimate(flops=flops, transcendentals=0,
                                      bytes_accessed=bytes_accessed),
    )(x_t_bf16, wc, bc, w1a, w1b, b1, w2, b2, w3, b3)


@jax.jit
def wave_structure_classifier_lanes(x_t, params):
    """Lane-major API (no wrapper transposes): x_t (6, B) raw features ->
    logits (3, B) f32."""
    B = x_t.shape[1]
    block_b, n_blocks, vmem_limit = _pick_blocks(B)
    b_pad = n_blocks * block_b
    xb = x_t.astype(jnp.bfloat16)
    if b_pad != B:
        xb = jnp.pad(xb, ((0, 0), (0, b_pad - B)))
    out = _run_kernel(xb, _fold_params(params), block_b, n_blocks, vmem_limit)
    return out[:, :B]


@jax.jit
def wave_structure_classifier(x, params):
    """Module-compatible API: x (B, 3, 2) -> logits (B, 3).  The wrapper-side
    transpose now moves bf16 data (half the bytes of an f32 path); use
    wave_structure_classifier_lanes to avoid the transposes entirely."""
    B = x.shape[0]
    block_b, n_blocks, vmem_limit = _pick_blocks(B)
    b_pad = n_blocks * block_b
    xb = x.reshape(B, IN_FLAT).astype(jnp.bfloat16)   # cast fused with transpose
    if b_pad != B:
        xb = jnp.pad(xb, ((0, b_pad - B), (0, 0)))
    out_t = _run_kernel(xb.T, _fold_params(params), block_b, n_blocks,
                        vmem_limit)
    return out_t.T[:B]


def init_params(key):
    """Deterministic synthetic parameters matching the module's shapes."""
    ks = jax.random.split(key, 8)

    def xavier(k, fan_out, fan_in):
        std = (2.0 / (fan_in + fan_out)) ** 0.5
        return std * jax.random.normal(k, (fan_out, fan_in), jnp.float32)

    # Conv2d(1, 16, (3,2)) weight: (16, 1, 3, 2)
    wc = 0.3 * jax.random.normal(ks[0], (D_CONV, 1, 3, 2), jnp.float32)
    bc = 0.01 * jax.random.normal(ks[1], (D_CONV,), jnp.float32)
    w1 = xavier(ks[2], H1, D_CONV + IN_FLAT)   # (64, 22)
    b1 = jnp.zeros((H1,), jnp.float32)
    w2 = xavier(ks[3], H2, H1)                 # (32, 64)
    b2 = jnp.zeros((H2,), jnp.float32)
    w3 = xavier(ks[4], OUT_DIM, H2)            # (3, 32)
    b3 = jnp.zeros((OUT_DIM,), jnp.float32)

    input_min = jnp.array([0.1, 0.05, -0.9], jnp.float32)
    input_max = jnp.array([10.0, 20.0, 0.9], jnp.float32)
    return dict(wc=wc, bc=bc, w1=w1, b1=b1, w2=w2, b2=b2, w3=w3, b3=b3,
                input_min=input_min, input_max=input_max)


def _reference(x, params):
    """Pure-f32 JAX reference mirroring the PyTorch forward exactly."""
    B = x.shape[0]
    mn = params["input_min"][None, :, None]
    mx = params["input_max"][None, :, None]
    xn = 2.0 * (x - mn) / (mx - mn) - 1.0
    x_res = xn.reshape(B, IN_FLAT)
    wc = params["wc"].reshape(D_CONV, IN_FLAT)
    conv = jax.nn.relu(x_res @ wc.T + params["bc"])
    h = jnp.concatenate([conv, x_res], axis=1)
    h1 = jax.nn.relu(h @ params["w1"].T + params["b1"])
    h2 = jax.nn.relu(h1 @ params["w2"].T + params["b2"])
    return h2 @ params["w3"].T + params["b3"]


if __name__ == "__main__":
    key = jax.random.PRNGKey(0)
    k_x, k_p = jax.random.split(key)

    B = 8
    params = init_params(k_p)
    # Input: (B, 3, 2) L/R primitive states within [min, max] per primitive.
    u = jax.random.uniform(k_x, (B, 3, 2), jnp.float32)
    x = (params["input_min"][None, :, None]
         + u * (params["input_max"] - params["input_min"])[None, :, None])

    out = wave_structure_classifier(x, params)
    out = jax.block_until_ready(out)

    ref = _reference(x, params)
    assert out.shape == (B, OUT_DIM)
    assert jnp.allclose(out, ref, atol=3e-2, rtol=3e-2), "mismatch vs reference"

    # Lane-major path (no wrapper transposes) must agree as well.
    out_t = wave_structure_classifier_lanes(x.reshape(B, IN_FLAT).T, params)
    out_t = jax.block_until_ready(out_t)
    assert jnp.allclose(out_t.T, ref, atol=3e-2, rtol=3e-2), "lanes mismatch"

    print("KERNEL_OK")
</pallas_src>

<mosaic_0001>
module attributes {stable_mosaic.version = 11 : i64} {
  func.func @_classifier_kernel(%arg0: i32, %arg1: memref<6x128xbf16, #tpu.memory_space<vmem>>, %arg2: memref<16x6xbf16, #tpu.memory_space<vmem>>, %arg3: memref<16x1xf32, #tpu.memory_space<vmem>>, %arg4: memref<64x16xbf16, #tpu.memory_space<vmem>>, %arg5: memref<64x6xbf16, #tpu.memory_space<vmem>>, %arg6: memref<64x1xf32, #tpu.memory_space<vmem>>, %arg7: memref<32x64xbf16, #tpu.memory_space<vmem>>, %arg8: memref<32x1xf32, #tpu.memory_space<vmem>>, %arg9: memref<3x32xbf16, #tpu.memory_space<vmem>>, %arg10: memref<3x1xf32, #tpu.memory_space<vmem>>, %arg11: memref<3x128xf32, #tpu.memory_space<vmem>>) attributes {dimension_semantics = [#tpu.dimension_semantics<parallel>], iteration_bounds = array<i64: 1>, scalar_prefetch = 0 : i64, scratch_operands = 0 : i64, tpu.core_type = #tpu.core_type<tc>, window_params = [{transform_indices = @transform_0, window_bounds = array<i64: 6, 128>}, {pipeline_mode = #tpu.pipeline_mode<synchronous>, transform_indices = @transform_1, window_bounds = array<i64: 16, 6>}, {pipeline_mode = #tpu.pipeline_mode<synchronous>, transform_indices = @transform_2, window_bounds = array<i64: 16, 1>}, {pipeline_mode = #tpu.pipeline_mode<synchronous>, transform_indices = @transform_3, window_bounds = array<i64: 64, 16>}, {pipeline_mode = #tpu.pipeline_mode<synchronous>, transform_indices = @transform_4, window_bounds = array<i64: 64, 6>}, {pipeline_mode = #tpu.pipeline_mode<synchronous>, transform_indices = @transform_5, window_bounds = array<i64: 64, 1>}, {pipeline_mode = #tpu.pipeline_mode<synchronous>, transform_indices = @transform_6, window_bounds = array<i64: 32, 64>}, {pipeline_mode = #tpu.pipeline_mode<synchronous>, transform_indices = @transform_7, window_bounds = array<i64: 32, 1>}, {pipeline_mode = #tpu.pipeline_mode<synchronous>, transform_indices = @transform_8, window_bounds = array<i64: 3, 32>}, {pipeline_mode = #tpu.pipeline_mode<synchronous>, transform_indices = @transform_9, window_bounds = array<i64: 3, 1>}, {transform_indices = @transform_10, window_bounds = array<i64: 3, 128>}]} {
    %c0 = arith.constant 0 : index
    %c0_0 = arith.constant 0 : index
    %0 = vector.load %arg1[%c0, %c0_0] : memref<6x128xbf16, #tpu.memory_space<vmem>>, vector<6x128xbf16>
    %c0_1 = arith.constant 0 : index
    %c0_2 = arith.constant 0 : index
    %1 = vector.load %arg2[%c0_1, %c0_2] : memref<16x6xbf16, #tpu.memory_space<vmem>>, vector<16x6xbf16>
    %cst = arith.constant dense<0.000000e+00> : vector<16x128xf32>
    %2 = tpu.matmul %1, %0, %cst {dimension_numbers = #tpu.dot_dimension_numbers<[1], [0], [0], [1], [0, 0, 1, 1], [], []>} : vector<16x6xbf16>, vector<6x128xbf16>, vector<16x128xf32> -> vector<16x128xf32>
    %c0_3 = arith.constant 0 : index
    %c0_4 = arith.constant 0 : index
    %3 = vector.load %arg3[%c0_3, %c0_4] : memref<16x1xf32, #tpu.memory_space<vmem>>, vector<16x1xf32>
    %4 = vector.broadcast %3 : vector<16x1xf32> to vector<16x128xf32>
    %5 = arith.addf %2, %4 : vector<16x128xf32>
    %6 = arith.truncf %5 : vector<16x128xf32> to vector<16x128xbf16>
    %cst_5 = arith.constant 0.000000e+00 : bf16
    %7 = vector.broadcast %cst_5 : bf16 to vector<16x128xbf16>
    %8 = arith.maximumf %6, %7 : vector<16x128xbf16>
    %c0_6 = arith.constant 0 : index
    %c0_7 = arith.constant 0 : index
    %9 = vector.load %arg4[%c0_6, %c0_7] : memref<64x16xbf16, #tpu.memory_space<vmem>>, vector<64x16xbf16>
    %cst_8 = arith.constant dense<0.000000e+00> : vector<64x128xf32>
    %10 = tpu.matmul %9, %8, %cst_8 {dimension_numbers = #tpu.dot_dimension_numbers<[1], [0], [0], [1], [0, 0, 1, 1], [], []>} : vector<64x16xbf16>, vector<16x128xbf16>, vector<64x128xf32> -> vector<64x128xf32>
    %c0_9 = arith.constant 0 : index
    %c0_10 = arith.constant 0 : index
    %11 = vector.load %arg5[%c0_9, %c0_10] : memref<64x6xbf16, #tpu.memory_space<vmem>>, vector<64x6xbf16>
    %cst_11 = arith.constant dense<0.000000e+00> : vector<64x128xf32>
    %12 = tpu.matmul %11, %0, %cst_11 {dimension_numbers = #tpu.dot_dimension_numbers<[1], [0], [0], [1], [0, 0, 1, 1], [], []>} : vector<64x6xbf16>, vector<6x128xbf16>, vector<64x128xf32> -> vector<64x128xf32>
    %13 = arith.addf %10, %12 : vector<64x128xf32>
    %c0_12 = arith.constant 0 : index
    %c0_13 = arith.constant 0 : index
    %14 = vector.load %arg6[%c0_12, %c0_13] : memref<64x1xf32, #tpu.memory_space<vmem>>, vector<64x1xf32>
    %15 = vector.broadcast %14 : vector<64x1xf32> to vector<64x128xf32>
    %16 = arith.addf %13, %15 : vector<64x128xf32>
    %17 = arith.truncf %16 : vector<64x128xf32> to vector<64x128xbf16>
    %cst_14 = arith.constant 0.000000e+00 : bf16
    %18 = vector.broadcast %cst_14 : bf16 to vector<64x128xbf16>
    %19 = arith.maximumf %17, %18 : vector<64x128xbf16>
    %c0_15 = arith.constant 0 : index
    %c0_16 = arith.constant 0 : index
    %20 = vector.load %arg7[%c0_15, %c0_16] : memref<32x64xbf16, #tpu.memory_space<vmem>>, vector<32x64xbf16>
    %cst_17 = arith.constant dense<0.000000e+00> : vector<32x128xf32>
    %21 = tpu.matmul %20, %19, %cst_17 {dimension_numbers = #tpu.dot_dimension_numbers<[1], [0], [0], [1], [0, 0, 1, 1], [], []>} : vector<32x64xbf16>, vector<64x128xbf16>, vector<32x128xf32> -> vector<32x128xf32>
    %c0_18 = arith.constant 0 : index
    %c0_19 = arith.constant 0 : index
    %22 = vector.load %arg8[%c0_18, %c0_19] : memref<32x1xf32, #tpu.memory_space<vmem>>, vector<32x1xf32>
    %23 = vector.broadcast %22 : vector<32x1xf32> to vector<32x128xf32>
    %24 = arith.addf %21, %23 : vector<32x128xf32>
    %25 = arith.truncf %24 : vector<32x128xf32> to vector<32x128xbf16>
    %cst_20 = arith.constant 0.000000e+00 : bf16
    %26 = vector.broadcast %cst_20 : bf16 to vector<32x128xbf16>
    %27 = arith.maximumf %25, %26 : vector<32x128xbf16>
    %c0_21 = arith.constant 0 : index
    %c0_22 = arith.constant 0 : index
    %28 = vector.load %arg9[%c0_21, %c0_22] : memref<3x32xbf16, #tpu.memory_space<vmem>>, vector<3x32xbf16>
    %cst_23 = arith.constant dense<0.000000e+00> : vector<3x128xf32>
    %29 = tpu.matmul %28, %27, %cst_23 {dimension_numbers = #tpu.dot_dimension_numbers<[1], [0], [0], [1], [0, 0, 1, 1], [], []>} : vector<3x32xbf16>, vector<32x128xbf16>, vector<3x128xf32> -> vector<3x128xf32>
    %c0_24 = arith.constant 0 : index
    %c0_25 = arith.constant 0 : index
    %30 = vector.load %arg10[%c0_24, %c0_25] : memref<3x1xf32, #tpu.memory_space<vmem>>, vector<3x1xf32>
    %31 = vector.broadcast %30 : vector<3x1xf32> to vector<3x128xf32>
    %32 = arith.addf %29, %31 : vector<3x128xf32>
    %c0_26 = arith.constant 0 : index
    %c0_27 = arith.constant 0 : index
    %33 = vector.load %arg11[%c0_26, %c0_27] : memref<3x128xf32, #tpu.memory_space<vmem>>, vector<3x128xf32>
    tpu.vector_store %arg11[%c0_26, %c0_27], %32 {strides = array<i32>} : memref<3x128xf32, #tpu.memory_space<vmem>>, vector<3x128xf32>,
    return
  }
  func.func @transform_0(%arg0: i32) -> (i32, i32) {
    %c0_i32 = arith.constant 0 : i32
    %c0_i32_0 = arith.constant 0 : i32
    return %c0_i32, %arg0 : i32, i32
  }
  func.func @transform_1(%arg0: i32) -> (i32, i32) {
    %c0_i32 = arith.constant 0 : i32
    %c0_i32_0 = arith.constant 0 : i32
    %c0_i32_1 = arith.constant 0 : i32
    return %c0_i32, %c0_i32_0 : i32, i32
  }
  func.func @transform_2(%arg0: i32) -> (i32, i32) {
    %c0_i32 = arith.constant 0 : i32
    %c0_i32_0 = arith.constant 0 : i32
    %c0_i32_1 = arith.constant 0 : i32
    return %c0_i32, %c0_i32_0 : i32, i32
  }
  func.func @transform_3(%arg0: i32) -> (i32, i32) {
    %c0_i32 = arith.constant 0 : i32
    %c0_i32_0 = arith.constant 0 : i32
    %c0_i32_1 = arith.constant 0 : i32
    return %c0_i32, %c0_i32_0 : i32, i32
  }
  func.func @transform_4(%arg0: i32) -> (i32, i32) {
    %c0_i32 = arith.constant 0 : i32
    %c0_i32_0 = arith.constant 0 : i32
    %c0_i32_1 = arith.constant 0 : i32
    return %c0_i32, %c0_i32_0 : i32, i32
  }
  func.func @transform_5(%arg0: i32) -> (i32, i32) {
    %c0_i32 = arith.constant 0 : i32
    %c0_i32_0 = arith.constant 0 : i32
    %c0_i32_1 = arith.constant 0 : i32
    return %c0_i32, %c0_i32_0 : i32, i32
  }
  func.func @transform_6(%arg0: i32) -> (i32, i32) {
    %c0_i32 = arith.constant 0 : i32
    %c0_i32_0 = arith.constant 0 : i32
    %c0_i32_1 = arith.constant 0 : i32
    return %c0_i32, %c0_i32_0 : i32, i32
  }
  func.func @transform_7(%arg0: i32) -> (i32, i32) {
    %c0_i32 = arith.constant 0 : i32
    %c0_i32_0 = arith.constant 0 : i32
    %c0_i32_1 = arith.constant 0 : i32
    return %c0_i32, %c0_i32_0 : i32, i32
  }
  func.func @transform_8(%arg0: i32) -> (i32, i32) {
    %c0_i32 = arith.constant 0 : i32
    %c0_i32_0 = arith.constant 0 : i32
    %c0_i32_1 = arith.constant 0 : i32
    return %c0_i32, %c0_i32_0 : i32, i32
  }
  func.func @transform_9(%arg0: i32) -> (i32, i32) {
    %c0_i32 = arith.constant 0 : i32
    %c0_i32_0 = arith.constant 0 : i32
    %c0_i32_1 = arith.constant 0 : i32
    return %c0_i32, %c0_i32_0 : i32, i32
  }
  func.func @transform_10(%arg0: i32) -> (i32, i32) {
    %c0_i32 = arith.constant 0 : i32
    %c0_i32_0 = arith.constant 0 : i32
    return %c0_i32, %arg0 : i32, i32
  }
}

</mosaic_0001>

<llo_original>
// kernel: wave_structure_classifier.1
$region0: #{wave_structure_classifier.1}
  #allocation0 [shape = 'u32[]', space=smem, size = 0x4, offset = 0x4, fixed_abs, tag = 'smem constant byte address 0x4 - core index']
  #allocation1 [shape = 'u32[144,128]{1,0:T(1,128)}', space=vmem, size = 0x12000, scoped, tag = 'internal scratch']
  %s0 = inlined_call_operand.vmem [shape: bf16[6,128], index: 0, kind: input, shape index: {}]
  %s1 = inlined_call_operand.vmem [shape: bf16[16,6], index: 1, kind: input, shape index: {}]
  %s2 = inlined_call_operand.vmem [shape: f32[16,1], index: 2, kind: input, shape index: {}]
  %s3 = inlined_call_operand.vmem [shape: bf16[64,16], index: 3, kind: input, shape index: {}]
  %s4 = inlined_call_operand.vmem [shape: bf16[64,6], index: 4, kind: input, shape index: {}]
  %s5 = inlined_call_operand.vmem [shape: f32[64,1], index: 5, kind: input, shape index: {}]
  %s6 = inlined_call_operand.vmem [shape: bf16[32,64], index: 6, kind: input, shape index: {}]
  %s7 = inlined_call_operand.vmem [shape: f32[32,1], index: 7, kind: input, shape index: {}]
  %s8 = inlined_call_operand.vmem [shape: bf16[3,32], index: 8, kind: input, shape index: {}]
  %s9 = inlined_call_operand.vmem [shape: f32[3,1], index: 9, kind: input, shape index: {}]
  %s10 = inlined_call_operand.hbm [shape: f32[3,128], index: 10, kind: output, shape index: {}]
  %s11 = sld [smem:[#allocation0]]
  $region50: #{wave_structure_classifier.1} parent=0
    _
  %s13 = ssub.s32 1, %s11
  %s14 = scalar_select 0, %s13, %s11
  $region1: #{wave_structure_classifier.1} parent=0
    #allocation2 [shape = 'u8[2048]{0}', space=vmem, size = 0x800, scoped, tag = 'output window, operand 0, single buffered']
    #allocation3 [shape = 's32[1]{0}', space=sflag, size = 0x4, scoped, tag = 'scoped memory for wave_structure_classifier.1']
    %15 = vsyncpa [#allocation3], 0
    // Predicated region
    $region2: #{wave_structure_classifier.1} parent=1 // pred_check
      _
    $region3: #{wave_structure_classifier.1} parent=1 // pred_check_branch
      %17 = sbr.rel (0) target = $region5
    $region4: #{wave_structure_classifier.1} parent=1 // pred_region
      _
    $region5: #{wave_structure_classifier.1} parent=1 // pred_fallthru
      _
    // Predicated region
    $region6: #{wave_structure_classifier.1} parent=1 // pred_check
      _
    $region7: #{wave_structure_classifier.1} parent=1 // pred_check_branch
      %19 = sbr.rel (0) target = $region9
    $region8: #{wave_structure_classifier.1} parent=1 // pred_region
      _
    $region9: #{wave_structure_classifier.1} parent=1 // pred_fallthru
      _
    // Predicated region
    $region10: #{wave_structure_classifier.1} parent=1 // pred_check
      _
    $region11: #{wave_structure_classifier.1} parent=1 // pred_check_branch
      %21 = sbr.rel (0) target = $region13
    $region12: #{wave_structure_classifier.1} parent=1 // pred_region
      _
    $region13: #{wave_structure_classifier.1} parent=1 // pred_fallthru
      _
    // Predicated region
    $region14: #{wave_structure_classifier.1} parent=1 // pred_check
      _
    $region15: #{wave_structure_classifier.1} parent=1 // pred_check_branch
      %23 = sbr.rel (0) target = $region17
    $region16: #{wave_structure_classifier.1} parent=1 // pred_region
      _
    $region17: #{wave_structure_classifier.1} parent=1 // pred_fallthru
      _
    // Predicated region
    $region18: #{wave_structure_classifier.1} parent=1 // pred_check
      _
    $region19: #{wave_structure_classifier.1} parent=1 // pred_check_branch
      %25 = sbr.rel (0) target = $region21
    $region20: #{wave_structure_classifier.1} parent=1 // pred_region
      _
    $region21: #{wave_structure_classifier.1} parent=1 // pred_fallthru
      _
    // Predicated region
    $region22: #{wave_structure_classifier.1} parent=1 // pred_check
      _
    $region23: #{wave_structure_classifier.1} parent=1 // pred_check_branch
      %27 = sbr.rel (0) target = $region25
    $region24: #{wave_structure_classifier.1} parent=1 // pred_region
      _
    $region25: #{wave_structure_classifier.1} parent=1 // pred_fallthru
      _
    // Predicated region
    $region26: #{wave_structure_classifier.1} parent=1 // pred_check
      _
    $region27: #{wave_structure_classifier.1} parent=1 // pred_check_branch
      %29 = sbr.rel (0) target = $region29
    $region28: #{wave_structure_classifier.1} parent=1 // pred_region
      _
    $region29: #{wave_structure_classifier.1} parent=1 // pred_fallthru
      _
    // Predicated region
    $region30: #{wave_structure_classifier.1} parent=1 // pred_check
      _
    $region31: #{wave_structure_classifier.1} parent=1 // pred_check_branch
      %31 = sbr.rel (0) target = $region33
    $region32: #{wave_structure_classifier.1} parent=1 // pred_region
      _
    $region33: #{wave_structure_classifier.1} parent=1 // pred_fallthru
      _
    // Predicated region
    $region34: #{wave_structure_classifier.1} parent=1 // pred_check
      _
    $region35: #{wave_structure_classifier.1} parent=1 // pred_check_branch
      %33 = sbr.rel (0) target = $region37
    $region36: #{wave_structure_classifier.1} parent=1 // pred_region
      _
    $region37: #{wave_structure_classifier.1} parent=1 // pred_fallthru
      _
    // Predicated region
    $region38: #{wave_structure_classifier.1} parent=1 // pred_check
      _
    $region39: #{wave_structure_classifier.1} parent=1 // pred_check_branch
      %35 = sbr.rel (0) target = $region41
    $region40: #{wave_structure_classifier.1} parent=1 // pred_region
      _
    $region41: #{wave_structure_classifier.1} parent=1 // pred_fallthru
      _
    %v37 = vld [vmem:[%s0] sm:$0x7]
    %v38 = vld [vmem:[%s1] sm:$0xf]
    %v39 = vld [vmem:[%s1 + $0x4] sm:$0xf]
    %v40 = vld [vmem:[%s2] sm:$0xff]
    %v41 = vld [vmem:[%s2 + $0x8] sm:$0xff]
    %43 = vset.pattern.permute.xlu0 0
    %44 = vperm.xlu0 %43, %v40
    %v45 = vpop.permute.xlu0 %44
    %48 = vset.pattern.permute.xlu0 0
    %49 = vperm.xlu0 %48, %v41
    %v50 = vpop.permute.xlu0 %49
    %v54 = vunpack.c.l.b16 %v38
    %v55 = vunpack.c.l.b16 %v39
    %v56 = vpack.c.b16 %v55, %v54
    %vm57 = vcmask 48128
    %v59 = vsel %vm57, %v56, 0
    %vm61 = vcmask 1042432
    %v63 = vsel %vm61, %v37, 0
    %65 = vmatprep.subr.bf16.mxu0 0
    %66 = vmatpush1.bf16.msra.mxu0 %v63
    %67 = vmatprep.subr.bf16.mxu0 0
    %68 = vmatpush1.bf16.msra.mxu0 0
    %69 = vmatprep.subr.bf16.mxu0 0
    %70 = vmatpush1.bf16.msra.mxu0 0
    %71 = vmatprep.subr.bf16.mxu0 0
    %72 = vmatpush1.bf16.msra.mxu0 0
    %73 = vmatprep.subr.bf16.mxu0 0
    %74 = vmatpush1.bf16.msra.mxu0 0
    %75 = vmatprep.subr.bf16.mxu0 0
    %76 = vmatpush1.bf16.msra.mxu0 0
    %77 = vmatprep.subr.bf16.mxu0 0
    %78 = vmatpush1.bf16.msra.mxu0 0
    %79 = vmatprep.subr.bf16.mxu0 0
    %80 = vmatpush1.bf16.msra.mxu0 0
    %81 = vmatprep.subr.bf16.mxu0 0
    %82 = vmatpush1.bf16.msra.mxu0 0
    %83 = vmatprep.subr.bf16.mxu0 0
    %84 = vmatpush1.bf16.msra.mxu0 0
    %85 = vmatprep.subr.bf16.mxu0 0
    %86 = vmatpush1.bf16.msra.mxu0 0
    %87 = vmatprep.subr.bf16.mxu0 0
    %88 = vmatpush1.bf16.msra.mxu0 0
    %89 = vmatprep.subr.bf16.mxu0 0
    %90 = vmatpush1.bf16.msra.mxu0 0
    %91 = vmatprep.subr.bf16.mxu0 0
    %92 = vmatpush1.bf16.msra.mxu0 0
    %93 = vmatprep.subr.bf16.mxu0 0
    %94 = vmatpush1.bf16.msra.mxu0 0
    %95 = vmatprep.subr.bf16.mxu0 0
    %96 = vmatpush1.bf16.msra.mxu0 0
    %97 = vmatprep.mubr.bf16.mxu0 0
    %98 = vmatmul.mubr.bf16.gmra.mrb[0].mxu0 %v59
    %v99 = vpop.f32.mrb[0].mxu0
    %v100 = vadd.f32 %v45, %v99
    %v101 = vpop.f32.mrb[0].mxu0
    %v102 = vpop.f32.mrb[0].mxu0
    %v103 = vadd.f32 %v50, %v102
    %v104 = vpop.f32.mrb[0].mxu0
    %105 = vdwg.mxu0
    %v106 = vpack.c.bf16 %v103, %v100
    %v107 = vmax.bf16 %v106, 0
    %v108 = vld [vmem:[%s3] sm:$0xf]
    %v109 = vld [vmem:[%s3 + $0x4] sm:$0xf]
    %v110 = vld [vmem:[%s3 + $0x8] sm:$0xf]
    %v111 = vld [vmem:[%s3 + $0xc] sm:$0xf]
    %v112 = vld [vmem:[%s3 + $0x10] sm:$0xf]
    %v113 = vld [vmem:[%s3 + $0x14] sm:$0xf]
    %v114 = vld [vmem:[%s3 + $0x18] sm:$0xf]
    %v115 = vld [vmem:[%s3 + $0x1c] sm:$0xf]
    %v116 = vld [vmem:[%s4] sm:$0xf]
    %v117 = vld [vmem:[%s4 + $0x4] sm:$0xf]
    %v118 = vld [vmem:[%s4 + $0x8] sm:$0xf]
    %v119 = vld [vmem:[%s4 + $0xc] sm:$0xf]
    %v120 = vld [vmem:[%s4 + $0x10] sm:$0xf]
    %v121 = vld [vmem:[%s4 + $0x14] sm:$0xf]
    %v122 = vld [vmem:[%s4 + $0x18] sm:$0xf]
    %v123 = vld [vmem:[%s4 + $0x1c] sm:$0xf]
    %v132 = vunpack.c.l.b16 %v116
    %v133 = vunpack.c.l.b16 %v117
    %v134 = vunpack.c.l.b16 %v118
    %v135 = vunpack.c.l.b16 %v119
    %v136 = vunpack.c.l.b16 %v120
    %v137 = vunpack.c.l.b16 %v121
    %v138 = vunpack.c.l.b16 %v122
    %v139 = vunpack.c.l.b16 %v123
    %v140 = vpack.c.b16 %v133, %v132
    %v141 = vpack.c.b16 %v135, %v134
    %v142 = vpack.c.b16 %v137, %v136
    %v143 = vpack.c.b16 %v139, %v138
    %v145 = vsel %vm57, %v140, 0
    %v148 = vsel %vm57, %v141, 0
    %v151 = vsel %vm57, %v142, 0
    %v154 = vsel %vm57, %v143, 0
    %156 = vmatprep.subr.bf16.mxu0 0
    %157 = vmatpush1.bf16.msra.mxu0 %v63
    %158 = vmatprep.subr.bf16.mxu0 0
    %159 = vmatpush1.bf16.msra.mxu0 0
    %160 = vmatprep.subr.bf16.mxu0 0
    %161 = vmatpush1.bf16.msra.mxu0 0
    %162 = vmatprep.subr.bf16.mxu0 0
    %163 = vmatpush1.bf16.msra.mxu0 0
    %164 = vmatprep.subr.bf16.mxu0 0
    %165 = vmatpush1.bf16.msra.mxu0 0
    %166 = vmatprep.subr.bf16.mxu0 0
    %167 = vmatpush1.bf16.msra.mxu0 0
    %168 = vmatprep.subr.bf16.mxu0 0
    %169 = vmatpush1.bf16.msra.mxu0 0
    %170 = vmatprep.subr.bf16.mxu0 0
    %171 = vmatpush1.bf16.msra.mxu0 0
    %172 = vmatprep.subr.bf16.mxu0 0
    %173 = vmatpush1.bf16.msra.mxu0 0
    %174 = vmatprep.subr.bf16.mxu0 0
    %175 = vmatpush1.bf16.msra.mxu0 0
    %176 = vmatprep.subr.bf16.mxu0 0
    %177 = vmatpush1.bf16.msra.mxu0 0
    %178 = vmatprep.subr.bf16.mxu0 0
    %179 = vmatpush1.bf16.msra.mxu0 0
    %180 = vmatprep.subr.bf16.mxu0 0
    %181 = vmatpush1.bf16.msra.mxu0 0
    %182 = vmatprep.subr.bf16.mxu0 0
    %183 = vmatpush1.bf16.msra.mxu0 0
    %184 = vmatprep.subr.bf16.mxu0 0
    %185 = vmatpush1.bf16.msra.mxu0 0
    %186 = vmatprep.subr.bf16.mxu0 0
    %187 = vmatpush1.bf16.msra.mxu0 0
    %188 = vmatprep.mubr.bf16.mxu0 0
    %189 = vmatmul.mubr.bf16.gmra.mrb[0].mxu0 %v145
    %v190 = vpop.f32.mrb[0].mxu0
    %v191 = vadd.f32 0.0, %v190
    %v192 = vpop.f32.mrb[0].mxu0
    %v193 = vpop.f32.mrb[0].mxu0
    %v194 = vadd.f32 0.0, %v193
    %v195 = vpop.f32.mrb[0].mxu0
    %196 = vmatprep.mubr.bf16.mxu0 0
    %197 = vmatmul.mubr.bf16.gmra.mrb[0].mxu0 %v148
    %v198 = vpop.f32.mrb[0].mxu0
    %v199 = vadd.f32 0.0, %v198
    %v200 = vpop.f32.mrb[0].mxu0
    %v201 = vpop.f32.mrb[0].mxu0
    %v202 = vadd.f32 0.0, %v201
    %v203 = vpop.f32.mrb[0].mxu0
    %204 = vmatprep.mubr.bf16.mxu0 0
    %205 = vmatmul.mubr.bf16.gmra.mrb[0].mxu0 %v151
    %v206 = vpop.f32.mrb[0].mxu0
    %v207 = vadd.f32 0.0, %v206
    %v208 = vpop.f32.mrb[0].mxu0
    %v209 = vpop.f32.mrb[0].mxu0
    %v210 = vadd.f32 0.0, %v209
    %v211 = vpop.f32.mrb[0].mxu0
    %212 = vmatprep.mubr.bf16.mxu0 0
    %213 = vmatmul.mubr.bf16.gmra.mrb[0].mxu0 %v154
    %v214 = vpop.f32.mrb[0].mxu0
    %v215 = vadd.f32 0.0, %v214
    %v216 = vpop.f32.mrb[0].mxu0
    %v217 = vpop.f32.mrb[0].mxu0
    %v218 = vadd.f32 0.0, %v217
    %v219 = vpop.f32.mrb[0].mxu0
    %220 = vdwg.mxu0
    %v229 = vunpack.c.l.b16 %v108
    %v230 = vunpack.c.l.b16 %v109
    %v231 = vunpack.c.l.b16 %v110
    %v232 = vunpack.c.l.b16 %v111
    %v233 = vunpack.c.l.b16 %v112
    %v234 = vunpack.c.l.b16 %v113
    %v235 = vunpack.c.l.b16 %v114
    %v236 = vunpack.c.l.b16 %v115
    %v237 = vpack.c.b16 %v230, %v229
    %v238 = vpack.c.b16 %v232, %v231
    %v239 = vpack.c.b16 %v234, %v233
    %v240 = vpack.c.b16 %v236, %v235
    %vm241 = vcmask 130048
    %v243 = vsel %vm241, %v237, 0
    %v246 = vsel %vm241, %v238, 0
    %v249 = vsel %vm241, %v239, 0
    %v252 = vsel %vm241, %v240, 0
    %254 = vmatprep.subr.bf16.mxu0 0
    %255 = vmatpush1.bf16.msra.mxu0 %v107
    %256 = vmatprep.subr.bf16.mxu0 0
    %257 = vmatpush1.bf16.msra.mxu0 0
    %258 = vmatprep.subr.bf16.mxu0 0
    %259 = vmatpush1.bf16.msra.mxu0 0
    %260 = vmatprep.subr.bf16.mxu0 0
    %261 = vmatpush1.bf16.msra.mxu0 0
    %262 = vmatprep.subr.bf16.mxu0 0
    %263 = vmatpush1.bf16.msra.mxu0 0
    %264 = vmatprep.subr.bf16.mxu0 0
    %265 = vmatpush1.bf16.msra.mxu0 0
    %266 = vmatprep.subr.bf16.mxu0 0
    %267 = vmatpush1.bf16.msra.mxu0 0
    %268 = vmatprep.subr.bf16.mxu0 0
    %269 = vmatpush1.bf16.msra.mxu0 0
    %270 = vmatprep.subr.bf16.mxu0 0
    %271 = vmatpush1.bf16.msra.mxu0 0
    %272 = vmatprep.subr.bf16.mxu0 0
    %273 = vmatpush1.bf16.msra.mxu0 0
    %274 = vmatprep.subr.bf16.mxu0 0
    %275 = vmatpush1.bf16.msra.mxu0 0
    %276 = vmatprep.subr.bf16.mxu0 0
    %277 = vmatpush1.bf16.msra.mxu0 0
    %278 = vmatprep.subr.bf16.mxu0 0
    %279 = vmatpush1.bf16.msra.mxu0 0
    %280 = vmatprep.subr.bf16.mxu0 0
    %281 = vmatpush1.bf16.msra.mxu0 0
    %282 = vmatprep.subr.bf16.mxu0 0
    %283 = vmatpush1.bf16.msra.mxu0 0
    %284 = vmatprep.subr.bf16.mxu0 0
    %285 = vmatpush1.bf16.msra.mxu0 0
    %286 = vmatprep.mubr.bf16.mxu0 0
    %287 = vmatmul.mubr.bf16.gmra.mrb[0].mxu0 %v243
    %v288 = vpop.f32.mrb[0].mxu0
    %v289 = vadd.f32 %v191, %v288
    %v290 = vpop.f32.mrb[0].mxu0
    %v291 = vpop.f32.mrb[0].mxu0
    %v292 = vadd.f32 %v194, %v291
    %v293 = vpop.f32.mrb[0].mxu0
    %294 = vmatprep.mubr.bf16.mxu0 0
    %295 = vmatmul.mubr.bf16.gmra.mrb[0].mxu0 %v246
    %v296 = vpop.f32.mrb[0].mxu0
    %v297 = vadd.f32 %v199, %v296
    %v298 = vpop.f32.mrb[0].mxu0
    %v299 = vpop.f32.mrb[0].mxu0
    %v300 = vadd.f32 %v202, %v299
    %v301 = vpop.f32.mrb[0].mxu0
    %302 = vmatprep.mubr.bf16.mxu0 0
    %303 = vmatmul.mubr.bf16.gmra.mrb[0].mxu0 %v249
    %v304 = vpop.f32.mrb[0].mxu0
    %v305 = vadd.f32 %v207, %v304
    %v306 = vpop.f32.mrb[0].mxu0
    %v307 = vpop.f32.mrb[0].mxu0
    %v308 = vadd.f32 %v210, %v307
    %v309 = vpop.f32.mrb[0].mxu0
    %310 = vmatprep.mubr.bf16.mxu0 0
    %311 = vmatmul.mubr.bf16.gmra.mrb[0].mxu0 %v252
    %v312 = vpop.f32.mrb[0].mxu0
    %v313 = vadd.f32 %v215, %v312
    %v314 = vpop.f32.mrb[0].mxu0
    %v315 = vpop.f32.mrb[0].mxu0
    %v316 = vadd.f32 %v218, %v315
    %v317 = vpop.f32.mrb[0].mxu0
    %318 = vdwg.mxu0
    %v319 = vld [vmem:[%s5] sm:$0xff]
    %v320 = vld [vmem:[%s5 + $0x8] sm:$0xff]
    %v321 = vld [vmem:[%s5 + $0x10] sm:$0xff]
    %v322 = vld [vmem:[%s5 + $0x18] sm:$0xff]
    %v323 = vld [vmem:[%s5 + $0x20] sm:$0xff]
    %v324 = vld [vmem:[%s5 + $0x28] sm:$0xff]
    %v325 = vld [vmem:[%s5 + $0x30] sm:$0xff]
    %v326 = vld [vmem:[%s5 + $0x38] sm:$0xff]
    %328 = vset.pattern.permute.xlu0 0
    %329 = vperm.xlu0 %328, %v319
    %v330 = vpop.permute.xlu0 %329
    %333 = vset.pattern.permute.xlu0 0
    %334 = vperm.xlu0 %333, %v320
    %v335 = vpop.permute.xlu0 %334
    %338 = vset.pattern.permute.xlu0 0
    %339 = vperm.xlu0 %338, %v321
    %v340 = vpop.permute.xlu0 %339
    %343 = vset.pattern.permute.xlu0 0
    %344 = vperm.xlu0 %343, %v322
    %v345 = vpop.permute.xlu0 %344
    %348 = vset.pattern.permute.xlu0 0
    %349 = vperm.xlu0 %348, %v323
    %v350 = vpop.permute.xlu0 %349
    %353 = vset.pattern.permute.xlu0 0
    %354 = vperm.xlu0 %353, %v324
    %v355 = vpop.permute.xlu0 %354
    %358 = vset.pattern.permute.xlu0 0
    %359 = vperm.xlu0 %358, %v325
    %v360 = vpop.permute.xlu0 %359
    %363 = vset.pattern.permute.xlu0 0
    %364 = vperm.xlu0 %363, %v326
    %v365 = vpop.permute.xlu0 %364
    %v367 = vadd.f32 %v289, %v330
    %v368 = vadd.f32 %v292, %v335
    %v369 = vadd.f32 %v297, %v340
    %v370 = vadd.f32 %v300, %v345
    %v371 = vadd.f32 %v305, %v350
    %v372 = vadd.f32 %v308, %v355
    %v373 = vadd.f32 %v313, %v360
    %v374 = vadd.f32 %v316, %v365
    %v375 = vpack.c.bf16 %v368, %v367
    %v376 = vpack.c.bf16 %v370, %v369
    %v377 = vpack.c.bf16 %v372, %v371
    %v378 = vpack.c.bf16 %v374, %v373
    %v379 = vmax.bf16 %v375, 0
    %v380 = vmax.bf16 %v376, 0
    %v381 = vmax.bf16 %v377, 0
    %v382 = vmax.bf16 %v378, 0
    %v383 = vld [vmem:[%s6] sm:$0xf]
    %v384 = vld [vmem:[%s6 + $0x4] sm:$0xf]
    %v385 = vld [vmem:[%s6 + $0x8] sm:$0xf]
    %v386 = vld [vmem:[%s6 + $0xc] sm:$0xf]
    %v387 = vld [vmem:[%s7] sm:$0xff]
    %v388 = vld [vmem:[%s7 + $0x8] sm:$0xff]
    %v389 = vld [vmem:[%s7 + $0x10] sm:$0xff]
    %v390 = vld [vmem:[%s7 + $0x18] sm:$0xff]
    %392 = vset.pattern.permute.xlu0 0
    %393 = vperm.xlu0 %392, %v387
    %v394 = vpop.permute.xlu0 %393
    %397 = vset.pattern.permute.xlu0 0
    %398 = vperm.xlu0 %397, %v388
    %v399 = vpop.permute.xlu0 %398
    %402 = vset.pattern.permute.xlu0 0
    %403 = vperm.xlu0 %402, %v389
    %v404 = vpop.permute.xlu0 %403
    %407 = vset.pattern.permute.xlu0 0
    %408 = vperm.xlu0 %407, %v390
    %v409 = vpop.permute.xlu0 %408
    %v415 = vunpack.c.l.b16 %v383
    %v416 = vunpack.c.l.b16 %v384
    %v417 = vunpack.c.l.b16 %v385
    %v418 = vunpack.c.l.b16 %v386
    %v419 = vpack.c.b16 %v416, %v415
    %v420 = vpack.c.b16 %v418, %v417
    %vm421 = vcmask 523264
    %v423 = vsel %vm421, %v419, 0
    %v426 = vsel %vm421, %v420, 0
    %428 = vmatprep.subr.bf16.mxu0 0
    %429 = vmatpush1.bf16.msra.mxu0 %v379
    %430 = vmatprep.subr.bf16.mxu0 0
    %431 = vmatpush1.bf16.msra.mxu0 %v380
    %432 = vmatprep.subr.bf16.mxu0 0
    %433 = vmatpush1.bf16.msra.mxu0 %v381
    %434 = vmatprep.subr.bf16.mxu0 0
    %435 = vmatpush1.bf16.msra.mxu0 %v382
    %436 = vmatprep.subr.bf16.mxu0 0
    %437 = vmatpush1.bf16.msra.mxu0 0
    %438 = vmatprep.subr.bf16.mxu0 0
    %439 = vmatpush1.bf16.msra.mxu0 0
    %440 = vmatprep.subr.bf16.mxu0 0
    %441 = vmatpush1.bf16.msra.mxu0 0
    %442 = vmatprep.subr.bf16.mxu0 0
    %443 = vmatpush1.bf16.msra.mxu0 0
    %444 = vmatprep.subr.bf16.mxu0 0
    %445 = vmatpush1.bf16.msra.mxu0 0
    %446 = vmatprep.subr.bf16.mxu0 0
    %447 = vmatpush1.bf16.msra.mxu0 0
    %448 = vmatprep.subr.bf16.mxu0 0
    %449 = vmatpush1.bf16.msra.mxu0 0
    %450 = vmatprep.subr.bf16.mxu0 0
    %451 = vmatpush1.bf16.msra.mxu0 0
    %452 = vmatprep.subr.bf16.mxu0 0
    %453 = vmatpush1.bf16.msra.mxu0 0
    %454 = vmatprep.subr.bf16.mxu0 0
    %455 = vmatpush1.bf16.msra.mxu0 0
    %456 = vmatprep.subr.bf16.mxu0 0
    %457 = vmatpush1.bf16.msra.mxu0 0
    %458 = vmatprep.subr.bf16.mxu0 0
    %459 = vmatpush1.bf16.msra.mxu0 0
    %460 = vmatprep.mubr.bf16.mxu0 0
    %461 = vmatmul.mubr.bf16.gmra.mrb[0].mxu0 %v423
    %v462 = vpop.f32.mrb[0].mxu0
    %v463 = vadd.f32 %v394, %v462
    %v464 = vpop.f32.mrb[0].mxu0
    %v465 = vpop.f32.mrb[0].mxu0
    %v466 = vadd.f32 %v399, %v465
    %v467 = vpop.f32.mrb[0].mxu0
    %468 = vmatprep.mubr.bf16.mxu0 0
    %469 = vmatmul.mubr.bf16.gmra.mrb[0].mxu0 %v426
    %v470 = vpop.f32.mrb[0].mxu0
    %v471 = vadd.f32 %v404, %v470
    %v472 = vpop.f32.mrb[0].mxu0
    %v473 = vpop.f32.mrb[0].mxu0
    %v474 = vadd.f32 %v409, %v473
    %v475 = vpop.f32.mrb[0].mxu0
    %476 = vdwg.mxu0
    %v477 = vpack.c.bf16 %v466, %v463
    %v478 = vpack.c.bf16 %v474, %v471
    %v479 = vmax.bf16 %v477, 0
    %v480 = vmax.bf16 %v478, 0
    %v481 = vld [vmem:[%s8] sm:$0x3]
    %v482 = vld [vmem:[%s9] sm:$0x7]
    %484 = vset.pattern.permute.xlu0 0
    %485 = vperm.xlu0 %484, %v482
    %v486 = vpop.permute.xlu0 %485
    %vm488 = vcmask 261120
    %v490 = vsel %vm488, %v481, 0
    %492 = vmatprep.subr.bf16.mxu0 0
    %493 = vmatpush1.bf16.msra.mxu0 %v479
    %494 = vmatprep.subr.bf16.mxu0 0
    %495 = vmatpush1.bf16.msra.mxu0 %v480
    %496 = vmatprep.subr.bf16.mxu0 0
    %497 = vmatpush1.bf16.msra.mxu0 0
    %498 = vmatprep.subr.bf16.mxu0 0
    %499 = vmatpush1.bf16.msra.mxu0 0
    %500 = vmatprep.subr.bf16.mxu0 0
    %501 = vmatpush1.bf16.msra.mxu0 0
    %502 = vmatprep.subr.bf16.mxu0 0
    %503 = vmatpush1.bf16.msra.mxu0 0
    %504 = vmatprep.subr.bf16.mxu0 0
    %505 = vmatpush1.bf16.msra.mxu0 0
    %506 = vmatprep.subr.bf16.mxu0 0
    %507 = vmatpush1.bf16.msra.mxu0 0
    %508 = vmatprep.subr.bf16.mxu0 0
    %509 = vmatpush1.bf16.msra.mxu0 0
    %510 = vmatprep.subr.bf16.mxu0 0
    %511 = vmatpush1.bf16.msra.mxu0 0
    %512 = vmatprep.subr.bf16.mxu0 0
    %513 = vmatpush1.bf16.msra.mxu0 0
    %514 = vmatprep.subr.bf16.mxu0 0
    %515 = vmatpush1.bf16.msra.mxu0 0
    %516 = vmatprep.subr.bf16.mxu0 0
    %517 = vmatpush1.bf16.msra.mxu0 0
    %518 = vmatprep.subr.bf16.mxu0 0
    %519 = vmatpush1.bf16.msra.mxu0 0
    %520 = vmatprep.subr.bf16.mxu0 0
    %521 = vmatpush1.bf16.msra.mxu0 0
    %522 = vmatprep.subr.bf16.mxu0 0
    %523 = vmatpush1.bf16.msra.mxu0 0
    %524 = vmatprep.mubr.bf16.mxu0 0
    %525 = vmatmul.mubr.bf16.gmra.mrb[0].mxu0 %v490
    %v526 = vpop.f32.mrb[0].mxu0
    %v527 = vadd.f32 %v486, %v526
    %v528 = vpop.f32.mrb[0].mxu0
    %v529 = vpop.f32.mrb[0].mxu0
    %v530 = vpop.f32.mrb[0].mxu0
    %531 = vdwg.mxu0
    %532 = vst [vmem:[#allocation2] sm:$0x7] %v527
    // Predicated region
    $region42: #{wave_structure_classifier.1} parent=1 // pred_check
      _
    $region43: #{wave_structure_classifier.1} parent=1 // pred_check_branch
      %534 = sbr.rel (0) target = $region45
    $region44: #{wave_structure_classifier.1} parent=1 // pred_region
      %s536 = ssub.s32 64, 64
      %537 = vsyncadd [#allocation3], %s536
      %s539 = sshll.u32 [#allocation2], 4
      %s540 = int_to_ptr.vmem [resolvable:$true] %s539
      %542 = dma.vmem_to_hbm [thread:$0]  %s540, 64, %s10, [#allocation3]
    $region45: #{wave_structure_classifier.1} parent=1 // pred_fallthru
      _
    // Predicated region
    $region46: #{wave_structure_classifier.1} parent=1 // pred_check
      _
    $region47: #{wave_structure_classifier.1} parent=1 // pred_check_branch
      %544 = sbr.rel (0) target = $region49
    $region48: #{wave_structure_classifier.1} parent=1 // pred_region
      %545 = dma.done [#allocation3], 64
    $region49: #{wave_structure_classifier.1} parent=1 // pred_fallthru
      _
    %546 = vsyncpa [#allocation3], 1

</llo_original>
